<compile_context>
chip_gen: v7x
topology: tpu7x:2x2x1
jax: 0.10.0
libtpu: 0.0.40
codegen_flags: <defaults>
</compile_context>

<pallas_src>
import jax
import jax.numpy as jnp
from jax.experimental import pallas as pl
from jax.experimental.pallas import tpu as pltpu

_EPS = 1e-5
_MAX_TILE_BYTES = 4 * 1024 * 1024   # keep one tile <= ~4 MiB (v7x-friendly)
_MAX_BLOCK_ROWS = 512               # big, 8-aligned row blocks amortize step overhead


def _round_up(x, m):
    return (x + m - 1) // m * m


def _adain_kernel(x_ref, s_ref, o_ref):
    # x_ref / s_ref / o_ref : (block_rows, HW) VMEM tiles; each row is one (n, c).
    x = x_ref[...].astype(jnp.float32)
    s = s_ref[...].astype(jnp.float32)
    hw = x.shape[-1]

    # --- InstanceNorm2d on `input` (biased variance, eps=1e-5) ---
    x_mean = jnp.mean(x, axis=-1, keepdims=True)
    x_ctr = x - x_mean
    x_var = jnp.mean(x_ctr * x_ctr, axis=-1, keepdims=True)
    x_norm = x_ctr * jax.lax.rsqrt(x_var + _EPS)

    # --- style mean / std (unbiased variance, matching torch .var(dim=2)) ---
    s_mean = jnp.mean(s, axis=-1, keepdims=True)
    s_ctr = s - s_mean
    s_var = jnp.sum(s_ctr * s_ctr, axis=-1, keepdims=True) / (hw - 1)
    s_std = jnp.sqrt(s_var + _EPS)

    o_ref[...] = (s_std * x_norm + s_mean).astype(o_ref.dtype)


def adaptive_instance_norm(input_nchw, style_nchw):
    """AdaIN forward. input/style: (N, C, H, W), same shape."""
    assert input_nchw.shape == style_nchw.shape
    N, C, H, W = input_nchw.shape
    HW = H * W
    # Guard against divide-by-zero in the unbiased style variance.
    assert HW >= 2, "AdaIN needs H*W >= 2 (unbiased variance divides by HW-1)"

    rows = N * C
    x = input_nchw.reshape(rows, HW)
    s = style_nchw.reshape(rows, HW)

    itemsize = jnp.dtype(x.dtype).itemsize

    # Row-block: multiple of 8, as large as possible, but a single tile stays
    # under _MAX_TILE_BYTES so (2 inputs + 1 output) x double-buffering fits
    # comfortably inside v7x's 64 MiB VMEM.
    rows_cap_vmem = max(8, (_MAX_TILE_BYTES // (HW * itemsize)) // 8 * 8)
    block_rows = int(min(_MAX_BLOCK_ROWS, rows_cap_vmem, _round_up(rows, 8)))
    block_rows = max(8, (block_rows // 8) * 8)

    rows_padded = _round_up(rows, block_rows)
    if rows_padded != rows:
        pad = rows_padded - rows
        # Zero padding is numerically safe: eps keeps rsqrt/sqrt finite; the
        # padded rows are discarded below.
        x = jnp.pad(x, ((0, pad), (0, 0)))
        s = jnp.pad(s, ((0, pad), (0, 0)))

    grid = (rows_padded // block_rows,)
    block = pl.BlockSpec((block_rows, HW), lambda i: (i, 0))

    tile_bytes = block_rows * HW * itemsize
    # 6 in-flight tiles (2 inputs + 1 output, double-buffered) plus headroom.
    vmem_limit = int(min(64 * 1024 * 1024, max(8 * 1024 * 1024, 8 * tile_bytes)))

    out = pl.pallas_call(
        _adain_kernel,
        out_shape=jax.ShapeDtypeStruct((rows_padded, HW), input_nchw.dtype),
        grid_spec=pltpu.PrefetchScalarGridSpec(
            num_scalar_prefetch=0,
            grid=grid,
            in_specs=[block, block],
            out_specs=block,
        ),
        compiler_params=pltpu.CompilerParams(
            dimension_semantics=("parallel",),
            vmem_limit_bytes=vmem_limit,
        ),
    )(x, s)

    return out[:rows].reshape(N, C, H, W)


def _reference(input_nchw, style_nchw, eps=_EPS):
    # Pure-JAX reference matching the PyTorch module.
    N, C, H, W = input_nchw.shape
    xf = input_nchw.reshape(N, C, -1)
    sf = style_nchw.reshape(N, C, -1)
    # style: unbiased var
    s_mean = sf.mean(axis=2)
    s_var = sf.var(axis=2, ddof=1) + eps
    s_std = jnp.sqrt(s_var)
    # instance norm of input: biased var
    x_mean = xf.mean(axis=2, keepdims=True)
    x_var = xf.var(axis=2, keepdims=True)
    x_norm = (xf - x_mean) / jnp.sqrt(x_var + eps)
    out = s_std[:, :, None] * x_norm + s_mean[:, :, None]
    return out.reshape(N, C, H, W)


if __name__ == "__main__":
    key = jax.random.PRNGKey(0)
    k1, k2 = jax.random.split(key)
    N, C, H, W = 2, 4, 16, 16
    x = jax.random.normal(k1, (N, C, H, W), dtype=jnp.float32)
    style = jax.random.normal(k2, (N, C, H, W), dtype=jnp.float32) * 2.0 + 0.5

    out = adaptive_instance_norm(x, style)
    out = jax.block_until_ready(out)

    ref = _reference(x, style)
    assert out.shape == (N, C, H, W)
    assert jnp.allclose(out, ref, atol=1e-4, rtol=1e-4), "mismatch vs reference"

    print("KERNEL_OK")
</pallas_src>

<mosaic_0001>
module attributes {stable_mosaic.version = 11 : i64} {
  func.func @_adain_kernel(%arg0: i32, %arg1: memref<8x256xf32, #tpu.memory_space<vmem>>, %arg2: memref<8x256xf32, #tpu.memory_space<vmem>>, %arg3: memref<8x256xf32, #tpu.memory_space<vmem>>) attributes {dimension_semantics = [#tpu.dimension_semantics<parallel>], iteration_bounds = array<i64: 1>, scalar_prefetch = 0 : i64, scratch_operands = 0 : i64, tpu.core_type = #tpu.core_type<tc>, window_params = [{transform_indices = @transform_0, window_bounds = array<i64: 8, 256>}, {transform_indices = @transform_1, window_bounds = array<i64: 8, 256>}, {transform_indices = @transform_2, window_bounds = array<i64: 8, 256>}]} {
    %c0 = arith.constant 0 : index
    %c0_0 = arith.constant 0 : index
    %0 = vector.load %arg1[%c0, %c0_0] : memref<8x256xf32, #tpu.memory_space<vmem>>, vector<8x256xf32>
    %c0_1 = arith.constant 0 : index
    %c0_2 = arith.constant 0 : index
    %1 = vector.load %arg2[%c0_1, %c0_2] : memref<8x256xf32, #tpu.memory_space<vmem>>, vector<8x256xf32>
    %cst = arith.constant dense<0.000000e+00> : vector<8xf32>
    %2 = vector.multi_reduction <add>, %0, %cst [1] : vector<8x256xf32> to vector<8xf32>
    %3 = vector.shape_cast %2 : vector<8xf32> to vector<8x1xf32>
    %cst_3 = arith.constant 2.560000e+02 : f32
    %4 = vector.broadcast %cst_3 : f32 to vector<8x1xf32>
    %5 = arith.divf %3, %4 : vector<8x1xf32>
    %6 = vector.broadcast %5 : vector<8x1xf32> to vector<8x256xf32>
    %7 = arith.subf %0, %6 : vector<8x256xf32>
    %8 = arith.mulf %7, %7 : vector<8x256xf32>
    %cst_4 = arith.constant dense<0.000000e+00> : vector<8xf32>
    %9 = vector.multi_reduction <add>, %8, %cst_4 [1] : vector<8x256xf32> to vector<8xf32>
    %10 = vector.shape_cast %9 : vector<8xf32> to vector<8x1xf32>
    %cst_5 = arith.constant 2.560000e+02 : f32
    %11 = vector.broadcast %cst_5 : f32 to vector<8x1xf32>
    %12 = arith.divf %10, %11 : vector<8x1xf32>
    %cst_6 = arith.constant 9.99999974E-6 : f32
    %13 = vector.broadcast %cst_6 : f32 to vector<8x1xf32>
    %14 = arith.addf %12, %13 : vector<8x1xf32>
    %15 = math.rsqrt %14 : vector<8x1xf32>
    %16 = vector.broadcast %15 : vector<8x1xf32> to vector<8x256xf32>
    %17 = arith.mulf %7, %16 : vector<8x256xf32>
    %cst_7 = arith.constant dense<0.000000e+00> : vector<8xf32>
    %18 = vector.multi_reduction <add>, %1, %cst_7 [1] : vector<8x256xf32> to vector<8xf32>
    %19 = vector.shape_cast %18 : vector<8xf32> to vector<8x1xf32>
    %cst_8 = arith.constant 2.560000e+02 : f32
    %20 = vector.broadcast %cst_8 : f32 to vector<8x1xf32>
    %21 = arith.divf %19, %20 : vector<8x1xf32>
    %22 = vector.broadcast %21 : vector<8x1xf32> to vector<8x256xf32>
    %23 = arith.subf %1, %22 : vector<8x256xf32>
    %24 = arith.mulf %23, %23 : vector<8x256xf32>
    %cst_9 = arith.constant dense<0.000000e+00> : vector<8xf32>
    %25 = vector.multi_reduction <add>, %24, %cst_9 [1] : vector<8x256xf32> to vector<8xf32>
    %26 = vector.shape_cast %25 : vector<8xf32> to vector<8x1xf32>
    %cst_10 = arith.constant 2.550000e+02 : f32
    %27 = vector.broadcast %cst_10 : f32 to vector<8x1xf32>
    %28 = arith.divf %26, %27 : vector<8x1xf32>
    %cst_11 = arith.constant 9.99999974E-6 : f32
    %29 = vector.broadcast %cst_11 : f32 to vector<8x1xf32>
    %30 = arith.addf %28, %29 : vector<8x1xf32>
    %31 = math.sqrt %30 : vector<8x1xf32>
    %32 = vector.broadcast %31 : vector<8x1xf32> to vector<8x256xf32>
    %33 = arith.mulf %32, %17 : vector<8x256xf32>
    %34 = vector.broadcast %21 : vector<8x1xf32> to vector<8x256xf32>
    %35 = arith.addf %33, %34 : vector<8x256xf32>
    %c0_12 = arith.constant 0 : index
    %c0_13 = arith.constant 0 : index
    %36 = vector.load %arg3[%c0_12, %c0_13] : memref<8x256xf32, #tpu.memory_space<vmem>>, vector<8x256xf32>
    tpu.vector_store %arg3[%c0_12, %c0_13], %35 {strides = array<i32>} : memref<8x256xf32, #tpu.memory_space<vmem>>, vector<8x256xf32>,
    return
  }
  func.func @transform_0(%arg0: i32) -> (i32, i32) {
    %c0_i32 = arith.constant 0 : i32
    %c0_i32_0 = arith.constant 0 : i32
    return %arg0, %c0_i32 : i32, i32
  }
  func.func @transform_1(%arg0: i32) -> (i32, i32) {
    %c0_i32 = arith.constant 0 : i32
    %c0_i32_0 = arith.constant 0 : i32
    return %arg0, %c0_i32 : i32, i32
  }
  func.func @transform_2(%arg0: i32) -> (i32, i32) {
    %c0_i32 = arith.constant 0 : i32
    %c0_i32_0 = arith.constant 0 : i32
    return %arg0, %c0_i32 : i32, i32
  }
}

</mosaic_0001>

<llo_original>
// kernel: tpu_custom_call.1
$region0: #{tpu_custom_call.1}
  #allocation0 [shape = 'u32[]', space=smem, size = 0x4, offset = 0x4, fixed_abs, tag = 'smem constant byte address 0x4 - core index']
  #allocation1 [shape = 'u32[144,128]{1,0:T(1,128)}', space=vmem, size = 0x12000, scoped, tag = 'internal scratch']
  %s0 = inlined_call_operand.hbm [shape: f32[8,256], index: 0, kind: input, shape index: {}]
  %s1 = inlined_call_operand.hbm [shape: f32[8,256], index: 1, kind: input, shape index: {}]
  %s2 = inlined_call_operand.hbm [shape: f32[8,256], index: 2, kind: output, shape index: {}]
  %s3 = sld [smem:[#allocation0]]
  $region26: #{tpu_custom_call.1} parent=0
    _
  %s5 = ssub.s32 1, %s3
  %s6 = scalar_select 0, %s5, %s3
  $region1: #{tpu_custom_call.1} parent=0
    #allocation2 [shape = 'u8[8192]{0}', space=vmem, size = 0x2000, scoped, tag = 'input window, operand 0, single buffered']
    #allocation3 [shape = 's32[1]{0}', space=sflag, size = 0x4, scoped, tag = 'scoped memory for tpu_custom_call.1']
    #allocation4 [shape = 's32[1]{0}', space=sflag, size = 0x4, scoped, tag = 'scoped memory for tpu_custom_call.1']
    #allocation5 [shape = 'u8[8192]{0}', space=vmem, size = 0x2000, scoped, tag = 'input window, operand 1, single buffered']
    #allocation6 [shape = 's32[1]{0}', space=sflag, size = 0x4, scoped, tag = 'scoped memory for tpu_custom_call.1']
    #allocation7 [shape = 'u8[8192]{0}', space=vmem, size = 0x2000, scoped, tag = 'output window, operand 0, single buffered']
    %7 = vsyncpa [#allocation3], 0
    %8 = vsyncpa [#allocation6], 0
    %9 = vsyncpa [#allocation4], 0
    // Predicated region
    $region2: #{tpu_custom_call.1} parent=1 // pred_check
      _
    $region3: #{tpu_custom_call.1} parent=1 // pred_check_branch
      %11 = sbr.rel (0) target = $region5
    $region4: #{tpu_custom_call.1} parent=1 // pred_region
      %s13 = ssub.s32 256, 256
      %14 = vsyncadd [#allocation3], %s13
      %s16 = sshll.u32 [#allocation2], 4
      %s17 = int_to_ptr.vmem [resolvable:$true] %s16
      %19 = dma.hbm_to_vmem [thread:$0]  %s0, 256, %s17, [#allocation3]
    $region5: #{tpu_custom_call.1} parent=1 // pred_fallthru
      _
    // Predicated region
    $region6: #{tpu_custom_call.1} parent=1 // pred_check
      _
    $region7: #{tpu_custom_call.1} parent=1 // pred_check_branch
      %21 = sbr.rel (0) target = $region9
    $region8: #{tpu_custom_call.1} parent=1 // pred_region
      %s23 = ssub.s32 256, 256
      %24 = vsyncadd [#allocation6], %s23
      %s26 = sshll.u32 [#allocation5], 4
      %s27 = int_to_ptr.vmem [resolvable:$true] %s26
      %29 = dma.hbm_to_vmem [thread:$0]  %s1, 256, %s27, [#allocation6]
    $region9: #{tpu_custom_call.1} parent=1 // pred_fallthru
      _
    // Predicated region
    $region10: #{tpu_custom_call.1} parent=1 // pred_check
      _
    $region11: #{tpu_custom_call.1} parent=1 // pred_check_branch
      %31 = sbr.rel (0) target = $region13
    $region12: #{tpu_custom_call.1} parent=1 // pred_region
      %32 = dma.done [#allocation3], 256
    $region13: #{tpu_custom_call.1} parent=1 // pred_fallthru
      _
    // Predicated region
    $region14: #{tpu_custom_call.1} parent=1 // pred_check
      _
    $region15: #{tpu_custom_call.1} parent=1 // pred_check_branch
      %34 = sbr.rel (0) target = $region17
    $region16: #{tpu_custom_call.1} parent=1 // pred_region
      %35 = dma.done [#allocation6], 256
    $region17: #{tpu_custom_call.1} parent=1 // pred_fallthru
      _
    %v36 = vld [vmem:[#allocation2] sm:$0xff]
    %v37 = vld [vmem:[#allocation2 + $0x8] sm:$0xff]
    %v38 = vld [vmem:[#allocation5] sm:$0xff]
    %v39 = vld [vmem:[#allocation5 + $0x8] sm:$0xff]
    %v40 = vadd.f32 %v36, %v37
    %41 = vadd.xlane.f32.xlu0 %v40
    %v42 = vpop.xlane.xlu0 %41
    %v43 = vrcp.pop 256.0
    %v44 = vmul.f32 %v42, %v43
    %v45 = vsub.f32 %v36, %v44
    %v46 = vsub.f32 %v37, %v44
    %v47 = vmul.f32 %v45, %v45
    %v48 = vmul.f32 %v46, %v46
    %v49 = vadd.f32 %v47, %v48
    %50 = vadd.xlane.f32.xlu0 %v49
    %v51 = vpop.xlane.xlu0 %50
    %v52 = vmul.f32 %v51, %v43
    %v53 = vadd.f32 %v52, 1e-05
    %v54 = vrsqrt.pop %v53
    %v55 = vmul.f32 %v45, %v54
    %v56 = vmul.f32 %v46, %v54
    %v57 = vadd.f32 %v38, %v39
    %58 = vadd.xlane.f32.xlu0 %v57
    %v59 = vpop.xlane.xlu0 %58
    %v60 = vmul.f32 %v59, %v43
    %v61 = vsub.f32 %v38, %v60
    %v62 = vsub.f32 %v39, %v60
    %v63 = vmul.f32 %v61, %v61
    %v64 = vmul.f32 %v62, %v62
    %v65 = vadd.f32 %v63, %v64
    %66 = vadd.xlane.f32.xlu0 %v65
    %v67 = vpop.xlane.xlu0 %66
    %v68 = vrcp.pop 255.0
    %v69 = vmul.f32 %v67, %v68
    %v70 = vadd.f32 %v69, 1e-05
    %v71 = vrsqrt.pop %v70
    %v72 = vmul.f32 %v70, %v71
    %vm73 = vcmp.eq.f32.partialorder %v70, inf
    %v74 = vsel %vm73, %v70, %v72
    %vm75 = vcmp.eq.f32.partialorder %v70, 0.0
    %v76 = vand.u32 %v70, 2147483648
    %v77 = vsel %vm75, %v76, %v74
    %v78 = vmul.f32 %v77, %v55
    %v79 = vmul.f32 %v77, %v56
    %v80 = vadd.f32 %v78, %v60
    %v81 = vadd.f32 %v79, %v60
    %82 = vst [vmem:[#allocation7] sm:$0xff] %v80
    %83 = vst [vmem:[#allocation7 + $0x8] sm:$0xff] %v81
    // Predicated region
    $region18: #{tpu_custom_call.1} parent=1 // pred_check
      _
    $region19: #{tpu_custom_call.1} parent=1 // pred_check_branch
      %85 = sbr.rel (0) target = $region21
    $region20: #{tpu_custom_call.1} parent=1 // pred_region
      %s87 = ssub.s32 256, 256
      %88 = vsyncadd [#allocation4], %s87
      %s90 = sshll.u32 [#allocation7], 4
      %s91 = int_to_ptr.vmem [resolvable:$true] %s90
      %93 = dma.vmem_to_hbm [thread:$0]  %s91, 256, %s2, [#allocation4]
    $region21: #{tpu_custom_call.1} parent=1 // pred_fallthru
      _
    // Predicated region
    $region22: #{tpu_custom_call.1} parent=1 // pred_check
      _
    $region23: #{tpu_custom_call.1} parent=1 // pred_check_branch
      %95 = sbr.rel (0) target = $region25
    $region24: #{tpu_custom_call.1} parent=1 // pred_region
      %96 = dma.done [#allocation4], 256
    $region25: #{tpu_custom_call.1} parent=1 // pred_fallthru
      _
    %97 = vsyncpa [#allocation3], 1
    %98 = vsyncpa [#allocation6], 1
    %99 = vsyncpa [#allocation4], 1

</llo_original>
